<compile_context>
chip_gen: v6e
topology: v6e:2x2x1
jax: 0.10.0
libtpu: 0.0.40
codegen_flags: <defaults>
</compile_context>

<pallas_src>
import functools

import jax
import jax.numpy as jnp
from jax.experimental import pallas as pl
from jax.experimental.pallas import tpu as pltpu

MARGIN = 1.0
EPS = 1e-9
NUM_CORES = 2            # leading "parallel" grid axis; both TensorCores on v7x
_MAX_TILE_ROWS = 8192    # bounds Mosaic unrolling / compile time
_MIB = 1024 * 1024


def _contrastive_kernel(o1_ref, o2_ref, t_ref, out_ref, dist_ref, acc_ref, *,
                        margin, eps, nb, nd):
    b = pl.program_id(1)
    d = pl.program_id(2)

    @pl.when((b == 0) & (d == 0))
    def _init_acc():
        acc_ref[...] = jnp.zeros_like(acc_ref)

    # Inputs stream in native dtype; upcast inside the kernel.
    o1 = o1_ref[...].astype(jnp.float32)
    o2 = o2_ref[...].astype(jnp.float32)
    diff = o2 - o1
    partial = jnp.sum(diff * diff, axis=1, keepdims=True)        # (TB, 1) sq-dist partial

    if nd == 1:
        dist = partial
    else:
        @pl.when(d == 0)
        def _init_dist():
            dist_ref[...] = jnp.zeros_like(dist_ref)
        dist_ref[...] += partial
        dist = dist_ref[...]

    def _tail():
        t = t_ref[...]                                           # (TB, 1); padded rows = 1.0
        hinge = jnp.maximum(margin - jnp.sqrt(dist + eps), 0.0)
        losses = 0.5 * (t * dist + (1.0 - t) * hinge * hinge)    # (TB, 1)
        acc_ref[...] += jnp.sum(losses)                          # broadcast into (8,128) acc

    if nd == 1:
        _tail()
    else:
        pl.when(d == nd - 1)(_tail)

    @pl.when((b == nb - 1) & (d == nd - 1))
    def _finalize():
        out_ref[...] = acc_ref[...]                              # all elements hold the partial


def _vmem_limit_bytes():
    """Generation-aware scoped-VMEM limit (~3/4 of per-core VMEM)."""
    cap = None
    try:
        info = pltpu.get_tpu_info()
        cap = int(getattr(info, "vmem_capacity_bytes", 0)) or None
    except Exception:
        cap = None
    try:
        kind = jax.devices()[0].device_kind.lower()
    except Exception:
        kind = ""
    if cap is None:
        cap = 64 * _MIB if ("7" in kind or not kind) else 128 * _MIB
    if "7" in kind:                      # v7x: 64 MiB per TensorCore
        cap = min(cap, 64 * _MIB)
    cap = min(cap, 128 * _MIB)
    return (cap * 3) // 4


def _choose_tiling(batch, feat, itemsize, budget_bytes):
    """Pick (tile_rows, tile_feat, n_batch_steps, n_feat_steps) per core."""
    rows_per_core = -(-batch // NUM_CORES)
    rows_per_core = max(8, ((rows_per_core + 7) // 8) * 8)
    # 2 inputs x 2 pipeline buffers of (TB, D) plus lane-padded (TB, 1) label buffers.
    bytes_per_row_full = 4 * feat * itemsize + 2 * 128 * 4
    max_rows_full = budget_bytes // bytes_per_row_full
    if max_rows_full >= 8:
        td = feat
        tb = min(rows_per_core, _MAX_TILE_ROWS, (max_rows_full // 8) * 8)
    else:
        # Very large D: tile the feature (reduction-last) axis as well.
        tb = max(8, (min(rows_per_core, 256) // 8) * 8)
        max_td = max(128, (budget_bytes - _MIB) // (4 * tb * itemsize))
        td = max(128, (max_td // 128) * 128)
    tb = max(8, tb)
    nb = -(-rows_per_core // tb)
    nd = -(-feat // td)
    return tb, td, nb, nd


def contrastive_loss(output1, output2, target, margin=MARGIN, size_average=True):
    """output1, output2: (B, D) float/bf16 embeddings; target: (B,) 0/1 labels."""
    B, D = output1.shape
    itemsize = jnp.dtype(output1.dtype).itemsize

    vmem_limit = _vmem_limit_bytes()
    budget = vmem_limit // 2
    tb, td, nb, nd = _choose_tiling(B, D, itemsize, budget)
    padded_b = NUM_CORES * nb * tb
    padded_d = nd * td

    t2d = target.reshape(-1, 1).astype(jnp.float32)
    o1, o2 = output1, output2
    if padded_b != B or padded_d != D:
        o1 = jnp.pad(o1, ((0, padded_b - B), (0, padded_d - D)))
        o2 = jnp.pad(o2, ((0, padded_b - B), (0, padded_d - D)))
        # Pad labels with 1.0: padded rows have dist == 0 so their loss is exactly 0;
        # no in-kernel validity mask is needed.
        t2d = jnp.pad(t2d, ((0, padded_b - B), (0, 0)), constant_values=1.0)

    kernel = functools.partial(_contrastive_kernel, margin=float(margin),
                               eps=float(EPS), nb=nb, nd=nd)

    cost = pl.CostEstimate(
        flops=int(3 * B * D + 10 * B),
        transcendentals=int(B),
        bytes_accessed=int(2 * B * D * itemsize + 4 * B + NUM_CORES * 8 * 128 * 4),
    )

    out = pl.pallas_call(
        kernel,
        out_shape=jax.ShapeDtypeStruct((NUM_CORES * 8, 128), jnp.float32),
        grid_spec=pltpu.PrefetchScalarGridSpec(
            num_scalar_prefetch=0,
            grid=(NUM_CORES, nb, nd),
            in_specs=[
                pl.BlockSpec((tb, td), lambda c, b, d: (c * nb + b, d)),
                pl.BlockSpec((tb, td), lambda c, b, d: (c * nb + b, d)),
                pl.BlockSpec((tb, 1), lambda c, b, d: (c * nb + b, 0)),
            ],
            out_specs=pl.BlockSpec((8, 128), lambda c, b, d: (c, 0)),
            scratch_shapes=[
                pltpu.VMEM((tb if nd > 1 else 8, 1), jnp.float32),  # running sq-dist over D tiles
                pltpu.VMEM((8, 128), jnp.float32),                  # per-core loss accumulator
            ],
        ),
        compiler_params=pltpu.CompilerParams(
            dimension_semantics=("parallel", "arbitrary", "arbitrary"),
            vmem_limit_bytes=int(vmem_limit),
        ),
        cost_estimate=cost,
    )(o1, o2, t2d)

    total = jnp.sum(out[0::8, 0])        # one partial sum per (potential) TensorCore
    if size_average:
        return total / jnp.float32(B)
    return total


def _reference(output1, output2, target, margin=MARGIN, size_average=True):
    o1 = output1.astype(jnp.float32)
    o2 = output2.astype(jnp.float32)
    distances = jnp.sum((o2 - o1) ** 2, axis=1)
    t = target.astype(jnp.float32)
    hinge = jnp.maximum(margin - jnp.sqrt(distances + EPS), 0.0)
    losses = 0.5 * (t * distances + (1.0 - t) * hinge ** 2)
    return jnp.mean(losses) if size_average else jnp.sum(losses)


if __name__ == "__main__":
    key = jax.random.PRNGKey(0)
    k1, k2, k3 = jax.random.split(key, 3)

    # Case 1: small f32 batch (single tile per core; core 1 sees only padding).
    B, D = 8, 32
    o1 = jax.random.normal(k1, (B, D), dtype=jnp.float32)
    o2 = jax.random.normal(k2, (B, D), dtype=jnp.float32)
    t = jax.random.bernoulli(k3, p=0.5, shape=(B,)).astype(jnp.int32)

    loss = jax.block_until_ready(contrastive_loss(o1, o2, t, margin=MARGIN, size_average=True))
    ref = _reference(o1, o2, t, margin=MARGIN, size_average=True)
    assert jnp.allclose(loss, ref, rtol=1e-5, atol=1e-6), (loss, ref)

    loss_sum = jax.block_until_ready(contrastive_loss(o1, o2, t, margin=MARGIN, size_average=False))
    ref_sum = _reference(o1, o2, t, margin=MARGIN, size_average=False)
    assert jnp.allclose(loss_sum, ref_sum, rtol=1e-5, atol=1e-6), (loss_sum, ref_sum)

    # Case 2: ragged batch (exercises zero-row / label=1.0 padding across both core slots).
    B2, D2 = 13, 32
    o1b = jax.random.normal(k1, (B2, D2), dtype=jnp.float32)
    o2b = jax.random.normal(k2, (B2, D2), dtype=jnp.float32)
    t2 = jax.random.bernoulli(k3, p=0.5, shape=(B2,)).astype(jnp.int32)
    loss2 = jax.block_until_ready(contrastive_loss(o1b, o2b, t2))
    ref2 = _reference(o1b, o2b, t2)
    assert jnp.allclose(loss2, ref2, rtol=1e-5, atol=1e-6), (loss2, ref2)

    # Case 3: bf16 embeddings, upcast inside the kernel (no f32 copies in HBM).
    B3, D3 = 16, 32
    o1c = jax.random.normal(k1, (B3, D3), dtype=jnp.bfloat16)
    o2c = jax.random.normal(k2, (B3, D3), dtype=jnp.bfloat16)
    t3 = jax.random.bernoulli(k3, p=0.5, shape=(B3,)).astype(jnp.int32)
    loss3 = jax.block_until_ready(contrastive_loss(o1c, o2c, t3))
    ref3 = _reference(o1c, o2c, t3)
    assert jnp.allclose(loss3, ref3, rtol=1e-4, atol=1e-4), (loss3, ref3)

    print("KERNEL_OK")
</pallas_src>

<mosaic_0001>
module attributes {stable_mosaic.version = 11 : i64} {
  func.func @_contrastive_kernel(%arg0: i32, %arg1: i32, %arg2: i32, %arg3: memref<8x32xf32, #tpu.memory_space<vmem>>, %arg4: memref<8x32xf32, #tpu.memory_space<vmem>>, %arg5: memref<8x1xf32, #tpu.memory_space<vmem>>, %arg6: memref<8x128xf32, #tpu.memory_space<vmem>>, %arg7: memref<8x1xf32, #tpu.memory_space<vmem>>, %arg8: memref<8x128xf32, #tpu.memory_space<vmem>>) attributes {dimension_semantics = [#tpu.dimension_semantics<parallel>, #tpu.dimension_semantics<arbitrary>, #tpu.dimension_semantics<arbitrary>], iteration_bounds = array<i64: 2, 1, 1>, scalar_prefetch = 0 : i64, scratch_operands = 2 : i64, tpu.core_type = #tpu.core_type<tc>, window_params = [{transform_indices = @transform_0, window_bounds = array<i64: 8, 32>}, {transform_indices = @transform_1, window_bounds = array<i64: 8, 32>}, {transform_indices = @transform_2, window_bounds = array<i64: 8, 1>}, {transform_indices = @transform_3, window_bounds = array<i64: 8, 128>}]} {
    %c0_i32 = arith.constant 0 : i32
    %0 = arith.cmpi eq, %arg1, %c0_i32 : i32
    %c0_i32_0 = arith.constant 0 : i32
    %1 = arith.cmpi eq, %arg2, %c0_i32_0 : i32
    %2 = arith.andi %0, %1 : i1
    %3 = arith.extui %2 : i1 to i32
    %c0_i32_1 = arith.constant 0 : i32
    %4 = arith.cmpi ne, %3, %c0_i32_1 : i32
    scf.if %4 {
      %cst_20 = arith.constant 0.000000e+00 : f32
      %40 = vector.broadcast %cst_20 : f32 to vector<8x128xf32>
      %c0_21 = arith.constant 0 : index
      %c0_22 = arith.constant 0 : index
      %41 = vector.load %arg8[%c0_21, %c0_22] : memref<8x128xf32, #tpu.memory_space<vmem>>, vector<8x128xf32>
      tpu.vector_store %arg8[%c0_21, %c0_22], %40 {strides = array<i32>} : memref<8x128xf32, #tpu.memory_space<vmem>>, vector<8x128xf32>,
    } else {
    }
    %c0 = arith.constant 0 : index
    %c0_2 = arith.constant 0 : index
    %5 = vector.load %arg3[%c0, %c0_2] : memref<8x32xf32, #tpu.memory_space<vmem>>, vector<8x32xf32>
    %c0_3 = arith.constant 0 : index
    %c0_4 = arith.constant 0 : index
    %6 = vector.load %arg4[%c0_3, %c0_4] : memref<8x32xf32, #tpu.memory_space<vmem>>, vector<8x32xf32>
    %7 = arith.subf %6, %5 : vector<8x32xf32>
    %8 = arith.mulf %7, %7 : vector<8x32xf32>
    %cst = arith.constant dense<0.000000e+00> : vector<8xf32>
    %9 = vector.multi_reduction <add>, %8, %cst [1] : vector<8x32xf32> to vector<8xf32>
    %10 = vector.shape_cast %9 : vector<8xf32> to vector<8x1xf32>
    %c0_5 = arith.constant 0 : index
    %c0_6 = arith.constant 0 : index
    %11 = vector.load %arg5[%c0_5, %c0_6] : memref<8x1xf32, #tpu.memory_space<vmem>>, vector<8x1xf32>
    %cst_7 = arith.constant 9.99999971E-10 : f32
    %12 = vector.broadcast %cst_7 : f32 to vector<8x1xf32>
    %13 = arith.addf %10, %12 : vector<8x1xf32>
    %14 = math.sqrt %13 : vector<8x1xf32>
    %cst_8 = arith.constant 1.000000e+00 : f32
    %15 = vector.broadcast %cst_8 : f32 to vector<8x1xf32>
    %16 = arith.subf %15, %14 : vector<8x1xf32>
    %cst_9 = arith.constant 0.000000e+00 : f32
    %17 = vector.broadcast %cst_9 : f32 to vector<8x1xf32>
    %18 = arith.maximumf %16, %17 : vector<8x1xf32>
    %19 = arith.mulf %11, %10 : vector<8x1xf32>
    %cst_10 = arith.constant 1.000000e+00 : f32
    %20 = vector.broadcast %cst_10 : f32 to vector<8x1xf32>
    %21 = arith.subf %20, %11 : vector<8x1xf32>
    %22 = arith.mulf %21, %18 : vector<8x1xf32>
    %23 = arith.mulf %22, %18 : vector<8x1xf32>
    %24 = arith.addf %19, %23 : vector<8x1xf32>
    %cst_11 = arith.constant 5.000000e-01 : f32
    %25 = vector.broadcast %cst_11 : f32 to vector<8x1xf32>
    %26 = arith.mulf %25, %24 : vector<8x1xf32>
    %c0_12 = arith.constant 0 : index
    %c0_13 = arith.constant 0 : index
    %27 = vector.load %arg8[%c0_12, %c0_13] : memref<8x128xf32, #tpu.memory_space<vmem>>, vector<8x128xf32>
    %28 = vector.shape_cast %26 : vector<8x1xf32> to vector<1x8x1xf32>
    %cst_14 = arith.constant dense<0.000000e+00> : vector<1xf32>
    %29 = vector.multi_reduction <add>, %28, %cst_14 [1, 2] : vector<1x8x1xf32> to vector<1xf32>
    %30 = vector.shape_cast %29 : vector<1xf32> to vector<1x1x1xf32>
    %31 = vector.extract %30[0, 0, 0] : f32 from vector<1x1x1xf32>
    %32 = vector.broadcast %31 : f32 to vector<8x128xf32>
    %33 = arith.addf %27, %32 : vector<8x128xf32>
    %c0_15 = arith.constant 0 : index
    %c0_16 = arith.constant 0 : index
    %34 = vector.load %arg8[%c0_15, %c0_16] : memref<8x128xf32, #tpu.memory_space<vmem>>, vector<8x128xf32>
    tpu.vector_store %arg8[%c0_15, %c0_16], %33 {strides = array<i32>} : memref<8x128xf32, #tpu.memory_space<vmem>>, vector<8x128xf32>,
    %c0_i32_17 = arith.constant 0 : i32
    %35 = arith.cmpi eq, %arg1, %c0_i32_17 : i32
    %c0_i32_18 = arith.constant 0 : i32
    %36 = arith.cmpi eq, %arg2, %c0_i32_18 : i32
    %37 = arith.andi %35, %36 : i1
    %38 = arith.extui %37 : i1 to i32
    %c0_i32_19 = arith.constant 0 : i32
    %39 = arith.cmpi ne, %38, %c0_i32_19 : i32
    scf.if %39 {
      %c0_20 = arith.constant 0 : index
      %c0_21 = arith.constant 0 : index
      %40 = vector.load %arg8[%c0_20, %c0_21] : memref<8x128xf32, #tpu.memory_space<vmem>>, vector<8x128xf32>
      %c0_22 = arith.constant 0 : index
      %c0_23 = arith.constant 0 : index
      %41 = vector.load %arg6[%c0_22, %c0_23] : memref<8x128xf32, #tpu.memory_space<vmem>>, vector<8x128xf32>
      tpu.vector_store %arg6[%c0_22, %c0_23], %40 {strides = array<i32>} : memref<8x128xf32, #tpu.memory_space<vmem>>, vector<8x128xf32>,
    } else {
    }
    return
  }
  func.func @transform_0(%arg0: i32, %arg1: i32, %arg2: i32) -> (i32, i32) {
    %c1_i32 = arith.constant 1 : i32
    %0 = arith.muli %arg0, %c1_i32 : i32
    %1 = arith.addi %0, %arg1 : i32
    %c0_i32 = arith.constant 0 : i32
    return %1, %arg2 : i32, i32
  }
  func.func @transform_1(%arg0: i32, %arg1: i32, %arg2: i32) -> (i32, i32) {
    %c1_i32 = arith.constant 1 : i32
    %0 = arith.muli %arg0, %c1_i32 : i32
    %1 = arith.addi %0, %arg1 : i32
    %c0_i32 = arith.constant 0 : i32
    return %1, %arg2 : i32, i32
  }
  func.func @transform_2(%arg0: i32, %arg1: i32, %arg2: i32) -> (i32, i32) {
    %c1_i32 = arith.constant 1 : i32
    %0 = arith.muli %arg0, %c1_i32 : i32
    %1 = arith.addi %0, %arg1 : i32
    %c0_i32 = arith.constant 0 : i32
    %c0_i32_0 = arith.constant 0 : i32
    return %1, %c0_i32 : i32, i32
  }
  func.func @transform_3(%arg0: i32, %arg1: i32, %arg2: i32) -> (i32, i32) {
    %c0_i32 = arith.constant 0 : i32
    %c0_i32_0 = arith.constant 0 : i32
    return %arg0, %c0_i32 : i32, i32
  }
}

</mosaic_0001>

<llo_original>
// kernel: tpu_custom_call.1
$region0: #{tpu_custom_call.1}
  #allocation0 [shape = 'u32[]', space=smem, size = 0x4, offset = 0x4, fixed_abs, tag = 'smem constant byte address 0x4 - core index']
  #allocation1 [shape = 'u32[144,128]{1,0:T(1,128)}', space=vmem, size = 0x12000, scoped, tag = 'internal scratch']
  #allocation2 [shape = 'f32[8,1]{1,0:T(8,128)}', space=vmem, size = 0x1000, scoped, tag = 'scratch operand']
  #allocation3 [shape = 'f32[8,128]{1,0:T(8,128)}', space=vmem, size = 0x1000, scoped, tag = 'scratch operand']
  %s0 = inlined_call_operand.vmem [shape: f32[16,32], index: 0, kind: input, shape index: {}]
  %s1 = inlined_call_operand.hbm [shape: f32[16,32], index: 1, kind: input, shape index: {}]
  %s2 = inlined_call_operand.vmem [shape: f32[16,1], index: 2, kind: input, shape index: {}]
  %s3 = inlined_call_operand.hbm [shape: f32[16,128], index: 3, kind: output, shape index: {}]
  %s4 = sld [smem:[#allocation0]]
  $region57: #{tpu_custom_call.1} parent=0
    _
  %s6 = ssub.s32 1, %s4
  %s7 = scalar_select 0, %s6, %s4
  $region1: #{tpu_custom_call.1} parent=0
    #allocation4 [shape = 'u8[8192]{0}', space=vmem, size = 0x2000, scoped, tag = 'input window, operand 1']
    #allocation5 [shape = 's32[2]{0}', space=sflag, size = 0x8, scoped, tag = 'scoped memory for tpu_custom_call.1']
    #allocation6 [shape = 's32[2]{0}', space=sflag, size = 0x8, scoped, tag = 'scoped memory for tpu_custom_call.1']
    #allocation7 [shape = 'u8[8192]{0}', space=vmem, size = 0x2000, scoped, tag = 'output window, operand 0']
    %8 = vsyncpa [#allocation5], 0
    %s9 = scalar_lea.sflag [#allocation5], 1
    %10 = vsyncpa %s9, 0
    %11 = vsyncpa [#allocation6], 0
    %s12 = scalar_lea.sflag [#allocation6], 1
    %13 = vsyncpa %s12, 0
    loop: start=0, step=1, limit=4
    $region2: #{tpu_custom_call.1} parent=1 // loop_pre_header
      _
    $region3: #{tpu_custom_call.1} parent=1 // loop_header
      %s15 = sphi 0, %s19
      %p16 = scmp.ge.s32.totalorder %s15, 4
      %s22 = sphi 0, %s41
      %s23 = sphi 0, %s37
      %s24 = sphi 0, %s33
      %s25 = sphi 0, %s22
      %s26 = sphi 0, %s23
      %s27 = sphi 0, %s24
      %s28 = sphi 0, %s25
      %s29 = sphi 0, %s26
      %s30 = sphi 0, %s27
      %s48 = sphi 0, %s50
      %s51 = sphi 0, %s48
      %s52 = sphi 0, %s51
      %s68 = sphi 0, %s52
      %s78 = sphi 0, %s80
      %s81 = sphi 0, %s78
      %s82 = sphi 0, %s81
      %s98 = sphi 0, %s82
      %s106 = sphi 0, %s108
      %s109 = sphi 0, %s106
      %s110 = sphi 0, %s109
      %s126 = sphi 0, %s110
      %s132 = sphi 0, %s134
      %s135 = sphi 0, %s132
      %s136 = sphi 0, %s135
      %s152 = sphi 0, %s136
    $region4: #{tpu_custom_call.1} parent=1 // loop_header_branch
      %18 = sbr.rel (%p16) target = $region8
    $region5: #{tpu_custom_call.1} parent=1 // loop_body
      %s20 = ssub.s32 %s15, 1
      %s21 = ssub.s32 %s15, 2
      %s31 = sadd.s32 1, %s24
      %p32 = scmp.ge.s32.totalorder %s31, 1
      %s33 = scalar_select %p32, 0, %s31
      %s34 = sadd.s32 1, %s23
      %s35 = scalar_select %p32, %s34, %s23
      %p36 = scmp.ge.s32.totalorder %s35, 1
      %s37 = scalar_select %p36, 0, %s35
      %s38 = sadd.s32 1, %s22
      %s39 = scalar_select %p36, %s38, %s22
      %p40 = scmp.ge.s32.totalorder %s39, 2
      %s41 = scalar_select %p40, 0, %s39
      %s42 = sadd.s32 %s22, %s23
      %s43 = sadd.s32 %s41, %s37
      %s44 = ssub.s32 %s42, %s43
      %s45 = ssub.s32 %s24, %s33
      %s46 = sor.u32 %s44, %s45
      %p47 = scmp.eq.s32.totalorder %s46, 0
      %s49 = sadd.s32 %s48, 1
      %s50 = scalar_select %p47, %s48, %s49
      %p53 = pneg %p47
      %p54 = scmp.eq.s32.totalorder %s15, 1
      %p55 = por %p53, %p54
      %p56 = scmp.ne.s32.totalorder %s48, %s51
      %p57 = scmp.eq.s32.totalorder %s15, 0
      %p58 = por %p56, %p57
      %p59 = scmp.ne.s32.totalorder %s48, %s51
      %p60 = scmp.eq.s32.totalorder %s20, 1
      %p61 = por %p59, %p60
      %p62 = scmp.ne.s32.totalorder %s51, %s52
      %p63 = scmp.eq.s32.totalorder %s20, 0
      %p64 = por %p62, %p63
      %p65 = scmp.ne.s32.totalorder %s51, %s52
      %p66 = scmp.eq.s32.totalorder %s21, 1
      %p67 = por %p65, %p66
      %p69 = scmp.ne.s32.totalorder %s52, %s68
      %p70 = scmp.eq.s32.totalorder %s21, 0
      %p71 = por %p69, %p70
      %s72 = sadd.s32 %s22, %s23
      %s73 = sadd.s32 %s41, %s37
      %s74 = ssub.s32 %s72, %s73
      %s75 = ssub.s32 %s24, %s33
      %s76 = sor.u32 %s74, %s75
      %p77 = scmp.eq.s32.totalorder %s76, 0
      %s79 = sadd.s32 %s78, 1
      %s80 = scalar_select %p77, %s78, %s79
      %p83 = pneg %p77
      %p84 = scmp.eq.s32.totalorder %s15, 1
      %p85 = por %p83, %p84
      %p86 = scmp.ne.s32.totalorder %s78, %s81
      %p87 = scmp.eq.s32.totalorder %s15, 0
      %p88 = por %p86, %p87
      %p89 = scmp.ne.s32.totalorder %s78, %s81
      %p90 = scmp.eq.s32.totalorder %s20, 1
      %p91 = por %p89, %p90
      %p92 = scmp.ne.s32.totalorder %s81, %s82
      %p93 = scmp.eq.s32.totalorder %s20, 0
      %p94 = por %p92, %p93
      %p95 = scmp.ne.s32.totalorder %s81, %s82
      %p96 = scmp.eq.s32.totalorder %s21, 1
      %p97 = por %p95, %p96
      %p99 = scmp.ne.s32.totalorder %s82, %s98
      %p100 = scmp.eq.s32.totalorder %s21, 0
      %p101 = por %p99, %p100
      %s102 = sadd.s32 %s22, %s23
      %s103 = sadd.s32 %s41, %s37
      %s104 = ssub.s32 %s102, %s103
      %p105 = scmp.eq.s32.totalorder %s104, 0
      %s107 = sadd.s32 %s106, 1
      %s108 = scalar_select %p105, %s106, %s107
      %p111 = pneg %p105
      %p112 = scmp.eq.s32.totalorder %s15, 1
      %p113 = por %p111, %p112
      %p114 = scmp.ne.s32.totalorder %s106, %s109
      %p115 = scmp.eq.s32.totalorder %s15, 0
      %p116 = por %p114, %p115
      %p117 = scmp.ne.s32.totalorder %s106, %s109
      %p118 = scmp.eq.s32.totalorder %s20, 1
      %p119 = por %p117, %p118
      %p120 = scmp.ne.s32.totalorder %s109, %s110
      %p121 = scmp.eq.s32.totalorder %s20, 0
      %p122 = por %p120, %p121
      %p123 = scmp.ne.s32.totalorder %s109, %s110
      %p124 = scmp.eq.s32.totalorder %s21, 1
      %p125 = por %p123, %p124
      %p127 = scmp.ne.s32.totalorder %s110, %s126
      %p128 = scmp.eq.s32.totalorder %s21, 0
      %p129 = por %p127, %p128
      %s130 = ssub.s32 %s22, %s41
      %p131 = scmp.eq.s32.totalorder %s130, 0
      %s133 = sadd.s32 %s132, 1
      %s134 = scalar_select %p131, %s132, %s133
      %p137 = pneg %p131
      %p138 = scmp.eq.s32.totalorder %s15, 1
      %p139 = por %p137, %p138
      %p140 = scmp.ne.s32.totalorder %s132, %s135
      %p141 = scmp.eq.s32.totalorder %s15, 0
      %p142 = por %p140, %p141
      %p143 = scmp.ne.s32.totalorder %s132, %s135
      %p144 = scmp.eq.s32.totalorder %s20, 1
      %p145 = por %p143, %p144
      %p146 = scmp.ne.s32.totalorder %s135, %s136
      %p147 = scmp.eq.s32.totalorder %s20, 0
      %p148 = por %p146, %p147
      %p149 = scmp.ne.s32.totalorder %s135, %s136
      %p150 = scmp.eq.s32.totalorder %s21, 1
      %p151 = por %p149, %p150
      %p153 = scmp.ne.s32.totalorder %s136, %s152
      %p154 = scmp.eq.s32.totalorder %s21, 0
      %p155 = por %p153, %p154
      %p156 = scmp.le.s32.totalorder 1, %s15
      %p157 = scmp.lt.s32.totalorder %s15, 3
      %p158 = pnand %p156, %p157
      %p159 = pneg %p158
      // Predicated region
      $region9: #{tpu_custom_call.1} parent=5 // pred_check
        _
      $region10: #{tpu_custom_call.1} parent=5 // pred_check_branch
        %161 = sbr.rel (%p158) target = $region12
      $region11: #{tpu_custom_call.1} parent=5 // pred_region
        %s162 = ssub.s32 %s15, 1
      $region12: #{tpu_custom_call.1} parent=5 // pred_fallthru
        _
      %p163 = scmp.lt.s32.totalorder %s15, 2
      // Predicated region
      $region13: #{tpu_custom_call.1} parent=5 // pred_check
        %p164 = pneg %p163
      $region14: #{tpu_custom_call.1} parent=5 // pred_check_branch
        %166 = sbr.rel (%p164) target = $region16
      $region15: #{tpu_custom_call.1} parent=5 // pred_region
        // Predicated region
        $region17: #{tpu_custom_call.1} parent=15 // pred_check
          %p167 = pneg %p58
        $region18: #{tpu_custom_call.1} parent=15 // pred_check_branch
          %169 = sbr.rel (%p167) target = $region20
        $region19: #{tpu_custom_call.1} parent=15 // pred_region
          %s170 = sadd.s32 %s22, %s23
          %p171 = scmp.lt.s32.totalorder %s170, 1
          %s172 = scalar_select %p171, %s170, 1
          %p173 = scmp.lt.s32.totalorder %s24, 0
          %s174 = scalar_select %p173, %s24, 0
          %s175 = sadd.s32 %s174, %s172
          %s176 = smul.addr %s175, 8
          %s177 = scalar_lea.vmem %s0, %s176
          %s178 = sadd.s32 %s22, %s23
        $region20: #{tpu_custom_call.1} parent=15 // pred_fallthru
          _
        // Predicated region
        $region21: #{tpu_custom_call.1} parent=15 // pred_check
          %p179 = pneg %p88
        $region22: #{tpu_custom_call.1} parent=15 // pred_check_branch
          %181 = sbr.rel (%p179) target = $region24
        $region23: #{tpu_custom_call.1} parent=15 // pred_region
          %s182 = sand.u32 %s78, 1
          %s183 = scalar_lea.sflag [#allocation5], %s182
          %s184 = sand.u32 %s78, 1
          %s185 = smul.addr %s184, 8
          %s186 = scalar_lea.vmem [#allocation4], %s185
          %s187 = sadd.s32 %s22, %s23
          %s189 = ssub.s32 128, 128
          %190 = vsyncadd %s183, %s189
          %s191 = sadd.s32 %s24, %s187
          %s192 = smul.addr %s191, 128
          %s193 = scalar_lea.hbm %s1, %s192
          %s195 = sshll.u32 %s186, 4
          %s196 = int_to_ptr.vmem [resolvable:$true] %s195
          %198 = dma.hbm_to_vmem [thread:$0]  %s193, 128, %s196, %s183
        $region24: #{tpu_custom_call.1} parent=15 // pred_fallthru
          _
        // Predicated region
        $region25: #{tpu_custom_call.1} parent=15 // pred_check
          %p199 = pneg %p116
        $region26: #{tpu_custom_call.1} parent=15 // pred_check_branch
          %201 = sbr.rel (%p199) target = $region28
        $region27: #{tpu_custom_call.1} parent=15 // pred_region
          %s202 = sadd.s32 %s22, %s23
          %p203 = scmp.lt.s32.totalorder %s202, 1
          %s204 = scalar_select %p203, %s202, 1
          %s205 = smul.addr %s204, 8
          %s206 = scalar_lea.vmem %s2, %s205
          %s207 = sadd.s32 %s22, %s23
        $region28: #{tpu_custom_call.1} parent=15 // pred_fallthru
          _
      $region16: #{tpu_custom_call.1} parent=5 // pred_fallthru
        _
      %p208 = scmp.le.s32.totalorder 1, %s15
      %p209 = scmp.lt.s32.totalorder %s15, 3
      %p210 = pnand %p208, %p209
      %p211 = pneg %p210
      // Predicated region
      $region29: #{tpu_custom_call.1} parent=5 // pred_check
        _
      $region30: #{tpu_custom_call.1} parent=5 // pred_check_branch
        %213 = sbr.rel (%p210) target = $region32
      $region31: #{tpu_custom_call.1} parent=5 // pred_region
        %s214 = ssub.s32 %s15, 1
        %s215 = sand.u32 %s81, 1
        %s216 = scalar_lea.sflag [#allocation5], %s215
        %s217 = sand.u32 %s81, 1
        %s218 = smul.addr %s217, 8
        %s219 = scalar_lea.vmem [#allocation4], %s218
        // Predicated region
        $region33: #{tpu_custom_call.1} parent=31 // pred_check
          %p220 = pneg %p94
        $region34: #{tpu_custom_call.1} parent=31 // pred_check_branch
          %222 = sbr.rel (%p220) target = $region36
        $region35: #{tpu_custom_call.1} parent=31 // pred_region
          %223 = dma.done %s216, 128
        $region36: #{tpu_custom_call.1} parent=31 // pred_fallthru
          _
        %s224 = sadd.s32 %s25, %s26
        %p225 = scmp.lt.s32.totalorder %s224, 1
        %s226 = scalar_select %p225, %s224, 1
        %p227 = scmp.lt.s32.totalorder %s27, 0
        %s228 = scalar_select %p227, %s27, 0
        %s229 = sadd.s32 %s228, %s226
        %s230 = smul.addr %s229, 8
        %s231 = scalar_lea.vmem %s0, %s230
        %p232 = pneg %p64
        %p233 = pneg %p61
        %s234 = sand.u32 %s81, 1
        %s235 = scalar_lea.sflag [#allocation5], %s234
        %s236 = sand.u32 %s81, 1
        %s237 = smul.addr %s236, 8
        %s238 = scalar_lea.vmem [#allocation4], %s237
        %p239 = pneg %p94
        %p240 = pneg %p91
        %s241 = sadd.s32 %s25, %s26
        %p242 = scmp.lt.s32.totalorder %s241, 1
        %s243 = scalar_select %p242, %s241, 1
        %s244 = smul.addr %s243, 8
        %s245 = scalar_lea.vmem %s2, %s244
        %p246 = pneg %p122
        %p247 = pneg %p119
        %p248 = pneg %p148
        %p249 = pneg %p145
        %s250 = sand.u32 %s135, 1
        %s251 = scalar_lea.sflag [#allocation6], %s250
        %s252 = sand.u32 %s135, 1
        %s253 = smul.addr %s252, 8
        %s254 = scalar_lea.vmem [#allocation7], %s253
        %s255 = sadd.s32 %s25, %s26
        %p256 = scmp.lt.s32.totalorder %s255, 1
        %s257 = scalar_select %p256, %s255, 1
        %p258 = scmp.lt.s32.totalorder %s27, 0
        %s259 = scalar_select %p258, %s27, 0
        %s260 = sadd.s32 %s259, %s257
        %s261 = smul.addr %s260, 8
        %s262 = scalar_lea.vmem %s0, %s261
        %s263 = sadd.s32 %s25, %s26
        %s264 = sadd.s32 %s25, %s26
        %s265 = sadd.s32 %s25, %s26
        %p266 = scmp.lt.s32.totalorder %s265, 1
        %s267 = scalar_select %p266, %s265, 1
        %s268 = smul.addr %s267, 8
        %s269 = scalar_lea.vmem %s2, %s268
        %s270 = sadd.s32 %s25, %s26
        %p271 = scmp.eq.s32.totalorder %s26, 0
        %p272 = scmp.eq.s32.totalorder %s27, 0
        %p273 = pnand %p271, %p272
        %p274 = pneg %p273
        // Predicated region
        $region37: #{tpu_custom_call.1} parent=31 // pred_check
          _
        $region38: #{tpu_custom_call.1} parent=31 // pred_check_branch
          %276 = sbr.rel (%p273) target = $region40
        $region39: #{tpu_custom_call.1} parent=31 // pred_region
          %277 = vst [vmem:[#allocation3] sm:$0xff] 0.0
        $region40: #{tpu_custom_call.1} parent=31 // pred_fallthru
          _
        %v278 = vld [vmem:[%s262] sm:$0xff]
        %v279 = vld [vmem:[%s219] sm:$0xff]
        %v280 = vsub.f32 %v279, %v278
        %v281 = vmul.f32 %v280, %v280
        %vm282 = vcmask 261120
        %v283 = vsel %vm282, %v281, 0.0
        %284 = vadd.xlane.f32.xlu0 %v283
        %v285 = vpop.xlane.xlu0 %284
        %v286 = vld [vmem:[%s269] sm:$0xff]
        %v287 = vadd.f32 %v285, 1e-09
        %v288 = vrsqrt.pop %v287
        %v289 = vmul.f32 %v287, %v288
        %vm290 = vcmp.eq.f32.partialorder %v287, inf
        %v291 = vsel %vm290, %v287, %v289
        %vm292 = vcmp.eq.f32.partialorder %v287, 0.0
        %v293 = vand.u32 %v287, 2147483648
        %v294 = vsel %vm292, %v293, %v291
        %v295 = vsub.f32 1.0, %v294
        %v296 = vmax.f32 %v295, 0.0
        %v297 = vmul.f32 %v286, %v285
        %v298 = vsub.f32 1.0, %v286
        %v299 = vmul.f32 %v298, %v296
        %v300 = vmul.f32 %v299, %v296
        %v301 = vadd.f32 %v297, %v300
        %v302 = vmul.f32 %v301, 0.5
        %v303 = vld [vmem:[#allocation3] sm:$0xff]
        %vm304 = vcmask 7168
        %v305 = vsel %vm304, %v302, 0.0
        %306 = vadd.xlane.f32.xlu0 %v305
        %v307 = vpop.xlane.xlu0 %306
        %v308 = vrot.slane %v307, 4
        %v309 = vadd.f32 %v307, %v308
        %v310 = vrot.slane %v309, 2
        %v311 = vadd.f32 %v309, %v310
        %v312 = vrot.slane %v311, 1
        %v313 = vadd.f32 %v311, %v312
        %s314 = vtos %v313
        %v315 = vstv %s314
        %v316 = vadd.f32 %v303, %v315
        %317 = vst [vmem:[#allocation3] sm:$0xff] %v316
        // Predicated region
        $region41: #{tpu_custom_call.1} parent=31 // pred_check
          _
        $region42: #{tpu_custom_call.1} parent=31 // pred_check_branch
          %319 = sbr.rel (%p273) target = $region44
        $region43: #{tpu_custom_call.1} parent=31 // pred_region
          %v320 = vld [vmem:[#allocation3] sm:$0xff]
          %321 = vst [vmem:[%s254] sm:$0xff] %v320
        $region44: #{tpu_custom_call.1} parent=31 // pred_fallthru
          _
        %s322 = sand.u32 %s135, 1
        %s323 = scalar_lea.sflag [#allocation6], %s322
        %s324 = sand.u32 %s135, 1
        %s325 = smul.addr %s324, 8
        %s326 = scalar_lea.vmem [#allocation7], %s325
        // Predicated region
        $region45: #{tpu_custom_call.1} parent=31 // pred_check
          %p327 = pneg %p145
        $region46: #{tpu_custom_call.1} parent=31 // pred_check_branch
          %329 = sbr.rel (%p327) target = $region48
        $region47: #{tpu_custom_call.1} parent=31 // pred_region
          %s331 = ssub.s32 128, 128
          %332 = vsyncadd %s323, %s331
          %s333 = smul.addr %s25, 128
          %s334 = scalar_lea.hbm %s3, %s333
          %s336 = sshll.u32 %s326, 4
          %s337 = int_to_ptr.vmem [resolvable:$true] %s336
          %339 = dma.vmem_to_hbm [thread:$0]  %s337, 128, %s334, %s323
        $region48: #{tpu_custom_call.1} parent=31 // pred_fallthru
          _
      $region32: #{tpu_custom_call.1} parent=5 // pred_fallthru
        _
      %p340 = scmp.le.s32.totalorder 2, %s15
      // Predicated region
      $region49: #{tpu_custom_call.1} parent=5 // pred_check
        %p341 = pneg %p340
      $region50: #{tpu_custom_call.1} parent=5 // pred_check_branch
        %343 = sbr.rel (%p341) target = $region52
      $region51: #{tpu_custom_call.1} parent=5 // pred_region
        %s344 = ssub.s32 %s15, 2
        // Predicated region
        $region53: #{tpu_custom_call.1} parent=51 // pred_check
          %p345 = pneg %p151
        $region54: #{tpu_custom_call.1} parent=51 // pred_check_branch
          %347 = sbr.rel (%p345) target = $region56
        $region55: #{tpu_custom_call.1} parent=51 // pred_region
          %s348 = sand.u32 %s136, 1
          %s349 = scalar_lea.sflag [#allocation6], %s348
          %s350 = sand.u32 %s136, 1
          %s351 = smul.addr %s350, 8
          %s352 = scalar_lea.vmem [#allocation7], %s351
          %353 = dma.done %s349, 128
        $region56: #{tpu_custom_call.1} parent=51 // pred_fallthru
          _
      $region52: #{tpu_custom_call.1} parent=5 // pred_fallthru
        _
    $region6: #{tpu_custom_call.1} parent=1 // loop_footer
      %s19 = sadd.s32 1, %s15
    $region7: #{tpu_custom_call.1} parent=1 // loop_footer_branch
      %14 = sbr.rel target = $region3
    $region8: #{tpu_custom_call.1} parent=1 // loop_exit
      _
    %354 = vsyncpa [#allocation5], 1
    %s355 = scalar_lea.sflag [#allocation5], 1
    %356 = vsyncpa %s355, 1
    %357 = vsyncpa [#allocation6], 1
    %s358 = scalar_lea.sflag [#allocation6], 1
    %359 = vsyncpa %s358, 1

</llo_original>
